<compile_context>
chip_gen: v7x
topology: tpu7x:2x2x1
jax: 0.10.0
libtpu: 0.0.40
codegen_flags: <defaults>
</compile_context>

<pallas_src>
import functools

import jax
import jax.numpy as jnp
from jax.experimental import pallas as pl
from jax.experimental.pallas import tpu as pltpu

HIDDEN = 768
FC1 = 256
NUM_CLASSES = 3
C_PAD = 128            # lane-dense padded class dimension
LN_EPS = 1e-5
NEG_INF = -1e30        # additive mask for padded logit lanes


def _round_up(x, m):
    return (x + m - 1) // m * m


def _choose_tm(B, tm_max):
    # >= 2 grid steps whenever possible (keeps both v7x TCs busy), tiles a
    # multiple of 8 rows, capped at tm_max.
    half = _round_up(pl.cdiv(B, 2), 8)
    return max(8, min(tm_max, half))


def head_kernel(x_ref, w1_ref, b1_ref, w2_ref, b2_ref, o_ref):
    # ---- LayerNorm(768): one-pass stats in f32 (biased variance) ----
    x = x_ref[...].astype(jnp.float32)                        # (TM, 768)
    inv_n = jnp.float32(1.0 / HIDDEN)
    mean = jnp.sum(x, axis=-1, keepdims=True) * inv_n
    ex2 = jnp.sum(x * x, axis=-1, keepdims=True) * inv_n
    var = ex2 - mean * mean
    xn = (x - mean) * jax.lax.rsqrt(var + LN_EPS)             # affine folded into w1/b1

    # ---- fc1 (LN affine folded) + ReLU: bf16 MXU operands, f32 accum ----
    h = jnp.dot(xn.astype(jnp.bfloat16), w1_ref[...],
                preferred_element_type=jnp.float32) + b1_ref[...]
    h = jnp.maximum(h, 0.0)                                   # (TM, 256)

    # Dropout(0.3): identity in eval mode (inference semantics).

    # ---- fc2: Linear(256 -> 3) padded to 128 lanes (pad bias = -1e30) ----
    logits = jnp.dot(h.astype(jnp.bfloat16), w2_ref[...],
                     preferred_element_type=jnp.float32) + b2_ref[...]

    # ---- LogSoftmax over classes (f32); pad lanes contribute exp()=0 ----
    m = jnp.max(logits, axis=-1, keepdims=True)
    s = logits - m
    lse = jnp.log(jnp.sum(jnp.exp(s), axis=-1, keepdims=True))
    o_ref[...] = (s - lse).astype(o_ref.dtype)                # (TM, 128) bf16, lane-dense


def prepare_params(gamma, beta, w1, b1, w2, b2):
    """One-time parameter prep (call at load time, NOT per forward)."""
    gamma = gamma.reshape(HIDDEN).astype(jnp.float32)
    beta = beta.reshape(HIDDEN).astype(jnp.float32)
    w1f = w1.astype(jnp.float32)
    # Fold LayerNorm affine into fc1.
    w1p = (gamma[:, None] * w1f).astype(jnp.bfloat16)                      # (768, 256)
    b1p = (b1.reshape(1, FC1).astype(jnp.float32) + beta @ w1f)            # (1, 256) f32
    # Pad fc2 classes 3 -> 128 lanes; pad bias = -1e30 masks pad lanes.
    w2p = jnp.zeros((FC1, C_PAD), jnp.bfloat16).at[:, :NUM_CLASSES].set(
        w2.astype(jnp.bfloat16))
    b2p = jnp.full((1, C_PAD), NEG_INF, jnp.float32).at[:, :NUM_CLASSES].set(
        b2.reshape(1, NUM_CLASSES).astype(jnp.float32))
    return w1p, b1p, w2p, b2p


@functools.partial(jax.jit, static_argnames=("tm",))
def bert_head_forward(cls_hs, w1p, b1p, w2p, b2p, *, tm=512):
    B = cls_hs.shape[0]
    TM = _choose_tm(B, tm)
    # Stream the input as bf16 (no-op if the pooler already hands us bf16).
    if cls_hs.dtype != jnp.bfloat16:
        cls_hs = cls_hs.astype(jnp.bfloat16)

    const = lambda i: (0, 0)
    out = pl.pallas_call(
        head_kernel,
        out_shape=jax.ShapeDtypeStruct((B, C_PAD), jnp.bfloat16),
        grid=(pl.cdiv(B, TM),),                               # partial last block OK
        in_specs=[
            pl.BlockSpec((TM, HIDDEN), lambda i: (i, 0)),     # cls_hs: batch-tiled bf16
            pl.BlockSpec((HIDDEN, FC1), const),               # w1' (bf16, VMEM-resident)
            pl.BlockSpec((1, FC1), const),                    # b1' (f32)
            pl.BlockSpec((FC1, C_PAD), const),                # w2 padded (bf16)
            pl.BlockSpec((1, C_PAD), const),                  # b2 padded (-1e30 mask)
        ],
        out_specs=pl.BlockSpec((TM, C_PAD), lambda i: (i, 0)),
        compiler_params=pltpu.CompilerParams(
            dimension_semantics=("parallel",)),
    )(cls_hs, w1p, b1p, w2p, b2p)
    return out[:, :NUM_CLASSES].astype(jnp.float32)


def init_params(key):
    k1, k2, k3, k4 = jax.random.split(key, 4)
    gamma = jnp.ones((HIDDEN,), jnp.float32)                  # LayerNorm weight
    beta = jnp.zeros((HIDDEN,), jnp.float32)                  # LayerNorm bias
    # nn.Linear default init ~ U(-1/sqrt(fan_in), 1/sqrt(fan_in)).
    w1 = jax.random.uniform(k1, (HIDDEN, FC1), jnp.float32,
                            minval=-1.0, maxval=1.0) / jnp.sqrt(HIDDEN)
    b1 = (jax.random.uniform(k2, (FC1,), jnp.float32,
                             minval=-1.0, maxval=1.0) / jnp.sqrt(HIDDEN))
    w2 = jax.random.uniform(k3, (FC1, NUM_CLASSES), jnp.float32,
                            minval=-1.0, maxval=1.0) / jnp.sqrt(FC1)
    b2 = (jax.random.uniform(k4, (NUM_CLASSES,), jnp.float32,
                             minval=-1.0, maxval=1.0) / jnp.sqrt(FC1))
    return gamma, beta, w1, b1, w2, b2


def reference_matched(cls_hs_bf16, gamma, beta, w1, b1, w2, b2):
    """Mirrors kernel numerics: bf16 input, f32 LN stats, folded affine,
    bf16 MXU operands with f32 accumulation."""
    x = cls_hs_bf16.astype(jnp.float32)
    mean = jnp.mean(x, axis=-1, keepdims=True)
    var = jnp.mean(x * x, axis=-1, keepdims=True) - mean * mean
    xn = (x - mean) * jax.lax.rsqrt(var + LN_EPS)
    w1_fold = (gamma[:, None] * w1).astype(jnp.bfloat16)
    b1_fold = b1 + beta @ w1
    h = jnp.maximum(
        jnp.dot(xn.astype(jnp.bfloat16), w1_fold,
                preferred_element_type=jnp.float32) + b1_fold, 0.0)
    logits = jnp.dot(h.astype(jnp.bfloat16), w2.astype(jnp.bfloat16),
                     preferred_element_type=jnp.float32) + b2
    return jax.nn.log_softmax(logits, axis=1)


def reference_f32(cls_hs, gamma, beta, w1, b1, w2, b2):
    """Full-precision module semantics (torch head in f32)."""
    x = cls_hs.astype(jnp.float32)
    mean = jnp.mean(x, axis=-1, keepdims=True)
    var = jnp.mean((x - mean) ** 2, axis=-1, keepdims=True)
    xn = (x - mean) / jnp.sqrt(var + LN_EPS) * gamma + beta
    h = jnp.maximum(xn @ w1 + b1, 0.0)
    logits = h @ w2 + b2
    return jax.nn.log_softmax(logits, axis=1)


if __name__ == "__main__":
    key = jax.random.PRNGKey(0)
    k_in, k_p = jax.random.split(key)
    raw_params = init_params(k_p)
    params = prepare_params(*raw_params)          # once, at parameter-load time

    # B=20 exercises multi-tile batching AND a partial last block (TM=16 -> grid=2).
    B = 20
    cls_hs = jax.random.normal(k_in, (B, HIDDEN), jnp.float32)
    cls_bf16 = cls_hs.astype(jnp.bfloat16)        # the pooler would hand us bf16

    out = jax.block_until_ready(bert_head_forward(cls_bf16, *params))
    assert out.shape == (B, NUM_CLASSES)

    ref_m = reference_matched(cls_bf16, *raw_params)
    ref_f = reference_f32(cls_hs, *raw_params)
    assert jnp.allclose(out, ref_m, atol=4e-2, rtol=4e-2), \
        "mismatch vs numerics-matched reference"
    assert jnp.allclose(out, ref_f, atol=1e-1, rtol=1e-1), \
        "mismatch vs f32 module reference"
    # Rows are valid log-prob distributions (within bf16 output quantization).
    assert jnp.allclose(jnp.sum(jnp.exp(out), axis=1), 1.0, atol=2e-2)

    print("KERNEL_OK")
</pallas_src>

<mosaic_0001>
module attributes {stable_mosaic.version = 11 : i64} {
  func.func @head_kernel(%arg0: i32, %arg1: memref<16x768xbf16, #tpu.memory_space<vmem>>, %arg2: memref<768x256xbf16, #tpu.memory_space<vmem>>, %arg3: memref<1x256xf32, #tpu.memory_space<vmem>>, %arg4: memref<256x128xbf16, #tpu.memory_space<vmem>>, %arg5: memref<1x128xf32, #tpu.memory_space<vmem>>, %arg6: memref<16x128xbf16, #tpu.memory_space<vmem>>) attributes {dimension_semantics = [#tpu.dimension_semantics<parallel>], iteration_bounds = array<i64: 2>, scalar_prefetch = 0 : i64, scratch_operands = 0 : i64, tpu.core_type = #tpu.core_type<tc>, window_params = [{transform_indices = @transform_0, window_bounds = array<i64: 16, 768>}, {pipeline_mode = #tpu.pipeline_mode<synchronous>, transform_indices = @transform_1, window_bounds = array<i64: 768, 256>}, {pipeline_mode = #tpu.pipeline_mode<synchronous>, transform_indices = @transform_2, window_bounds = array<i64: 1, 256>}, {pipeline_mode = #tpu.pipeline_mode<synchronous>, transform_indices = @transform_3, window_bounds = array<i64: 256, 128>}, {pipeline_mode = #tpu.pipeline_mode<synchronous>, transform_indices = @transform_4, window_bounds = array<i64: 1, 128>}, {transform_indices = @transform_5, window_bounds = array<i64: 16, 128>}]} {
    %c0 = arith.constant 0 : index
    %c0_0 = arith.constant 0 : index
    %0 = vector.load %arg1[%c0, %c0_0] : memref<16x768xbf16, #tpu.memory_space<vmem>>, vector<16x768xbf16>
    %1 = arith.extf %0 : vector<16x768xbf16> to vector<16x768xf32>
    %cst = arith.constant dense<0.000000e+00> : vector<16xf32>
    %2 = vector.multi_reduction <add>, %1, %cst [1] : vector<16x768xf32> to vector<16xf32>
    %3 = vector.shape_cast %2 : vector<16xf32> to vector<16x1xf32>
    %cst_1 = arith.constant 0.00130208337 : f32
    %4 = vector.broadcast %cst_1 : f32 to vector<16x1xf32>
    %5 = arith.mulf %3, %4 : vector<16x1xf32>
    %6 = arith.mulf %1, %1 : vector<16x768xf32>
    %cst_2 = arith.constant dense<0.000000e+00> : vector<16xf32>
    %7 = vector.multi_reduction <add>, %6, %cst_2 [1] : vector<16x768xf32> to vector<16xf32>
    %8 = vector.shape_cast %7 : vector<16xf32> to vector<16x1xf32>
    %cst_3 = arith.constant 0.00130208337 : f32
    %9 = vector.broadcast %cst_3 : f32 to vector<16x1xf32>
    %10 = arith.mulf %8, %9 : vector<16x1xf32>
    %11 = arith.mulf %5, %5 : vector<16x1xf32>
    %12 = arith.subf %10, %11 : vector<16x1xf32>
    %13 = vector.broadcast %5 : vector<16x1xf32> to vector<16x768xf32>
    %14 = arith.subf %1, %13 : vector<16x768xf32>
    %cst_4 = arith.constant 9.99999974E-6 : f32
    %15 = vector.broadcast %cst_4 : f32 to vector<16x1xf32>
    %16 = arith.addf %12, %15 : vector<16x1xf32>
    %17 = math.rsqrt %16 : vector<16x1xf32>
    %18 = vector.broadcast %17 : vector<16x1xf32> to vector<16x768xf32>
    %19 = arith.mulf %14, %18 : vector<16x768xf32>
    %20 = arith.truncf %19 : vector<16x768xf32> to vector<16x768xbf16>
    %c0_5 = arith.constant 0 : index
    %c0_6 = arith.constant 0 : index
    %21 = vector.load %arg2[%c0_5, %c0_6] : memref<768x256xbf16, #tpu.memory_space<vmem>>, vector<768x256xbf16>
    %cst_7 = arith.constant dense<0.000000e+00> : vector<16x256xf32>
    %22 = tpu.matmul %20, %21, %cst_7 {dimension_numbers = #tpu.dot_dimension_numbers<[1], [0], [0], [1], [0, 0, 1, 1], [], []>} : vector<16x768xbf16>, vector<768x256xbf16>, vector<16x256xf32> -> vector<16x256xf32>
    %c0_8 = arith.constant 0 : index
    %c0_9 = arith.constant 0 : index
    %23 = vector.load %arg3[%c0_8, %c0_9] : memref<1x256xf32, #tpu.memory_space<vmem>>, vector<1x256xf32>
    %24 = vector.broadcast %23 : vector<1x256xf32> to vector<16x256xf32>
    %25 = arith.addf %22, %24 : vector<16x256xf32>
    %cst_10 = arith.constant 0.000000e+00 : f32
    %26 = vector.broadcast %cst_10 : f32 to vector<16x256xf32>
    %27 = arith.maximumf %25, %26 : vector<16x256xf32>
    %28 = arith.truncf %27 : vector<16x256xf32> to vector<16x256xbf16>
    %c0_11 = arith.constant 0 : index
    %c0_12 = arith.constant 0 : index
    %29 = vector.load %arg4[%c0_11, %c0_12] : memref<256x128xbf16, #tpu.memory_space<vmem>>, vector<256x128xbf16>
    %cst_13 = arith.constant dense<0.000000e+00> : vector<16x128xf32>
    %30 = tpu.matmul %28, %29, %cst_13 {dimension_numbers = #tpu.dot_dimension_numbers<[1], [0], [0], [1], [0, 0, 1, 1], [], []>} : vector<16x256xbf16>, vector<256x128xbf16>, vector<16x128xf32> -> vector<16x128xf32>
    %c0_14 = arith.constant 0 : index
    %c0_15 = arith.constant 0 : index
    %31 = vector.load %arg5[%c0_14, %c0_15] : memref<1x128xf32, #tpu.memory_space<vmem>>, vector<1x128xf32>
    %32 = vector.broadcast %31 : vector<1x128xf32> to vector<16x128xf32>
    %33 = arith.addf %30, %32 : vector<16x128xf32>
    %cst_16 = arith.constant dense<0xFF800000> : vector<16xf32>
    %34 = vector.multi_reduction <maximumf>, %33, %cst_16 [1] : vector<16x128xf32> to vector<16xf32>
    %35 = vector.shape_cast %34 : vector<16xf32> to vector<16x1xf32>
    %36 = vector.broadcast %35 : vector<16x1xf32> to vector<16x128xf32>
    %37 = arith.subf %33, %36 : vector<16x128xf32>
    %38 = math.exp %37 : vector<16x128xf32>
    %cst_17 = arith.constant dense<0.000000e+00> : vector<16xf32>
    %39 = vector.multi_reduction <add>, %38, %cst_17 [1] : vector<16x128xf32> to vector<16xf32>
    %40 = vector.shape_cast %39 : vector<16xf32> to vector<16x1xf32>
    %41 = math.log %40 : vector<16x1xf32>
    %42 = vector.broadcast %41 : vector<16x1xf32> to vector<16x128xf32>
    %43 = arith.subf %37, %42 : vector<16x128xf32>
    %44 = arith.truncf %43 : vector<16x128xf32> to vector<16x128xbf16>
    %c0_18 = arith.constant 0 : index
    %c0_19 = arith.constant 0 : index
    %45 = vector.load %arg6[%c0_18, %c0_19] : memref<16x128xbf16, #tpu.memory_space<vmem>>, vector<16x128xbf16>
    tpu.vector_store %arg6[%c0_18, %c0_19], %44 {strides = array<i32>} : memref<16x128xbf16, #tpu.memory_space<vmem>>, vector<16x128xbf16>,
    return
  }
  func.func @transform_0(%arg0: i32) -> (i32, i32) {
    %c0_i32 = arith.constant 0 : i32
    %c0_i32_0 = arith.constant 0 : i32
    return %arg0, %c0_i32 : i32, i32
  }
  func.func @transform_1(%arg0: i32) -> (i32, i32) {
    %c0_i32 = arith.constant 0 : i32
    %c0_i32_0 = arith.constant 0 : i32
    %c0_i32_1 = arith.constant 0 : i32
    return %c0_i32, %c0_i32_0 : i32, i32
  }
  func.func @transform_2(%arg0: i32) -> (i32, i32) {
    %c0_i32 = arith.constant 0 : i32
    %c0_i32_0 = arith.constant 0 : i32
    %c0_i32_1 = arith.constant 0 : i32
    return %c0_i32, %c0_i32_0 : i32, i32
  }
  func.func @transform_3(%arg0: i32) -> (i32, i32) {
    %c0_i32 = arith.constant 0 : i32
    %c0_i32_0 = arith.constant 0 : i32
    %c0_i32_1 = arith.constant 0 : i32
    return %c0_i32, %c0_i32_0 : i32, i32
  }
  func.func @transform_4(%arg0: i32) -> (i32, i32) {
    %c0_i32 = arith.constant 0 : i32
    %c0_i32_0 = arith.constant 0 : i32
    %c0_i32_1 = arith.constant 0 : i32
    return %c0_i32, %c0_i32_0 : i32, i32
  }
  func.func @transform_5(%arg0: i32) -> (i32, i32) {
    %c0_i32 = arith.constant 0 : i32
    %c0_i32_0 = arith.constant 0 : i32
    return %arg0, %c0_i32 : i32, i32
  }
}

</mosaic_0001>

<llo_original>
// kernel: bert_head_forward.1
$region0: #{bert_head_forward.1}
  #allocation0 [shape = 'u32[]', space=smem, size = 0x4, offset = 0x4, fixed_abs, tag = 'smem constant byte address 0x4 - core index']
  #allocation1 [shape = 'u32[144,128]{1,0:T(1,128)}', space=vmem, size = 0x12000, scoped, tag = 'internal scratch']
  %s0 = inlined_call_operand.hbm [shape: bf16[20,768], index: 0, kind: input, shape index: {}]
  %s1 = inlined_call_operand.hbm [shape: bf16[768,256], index: 1, kind: input, shape index: {}]
  %s2 = inlined_call_operand.vmem [shape: f32[1,256], index: 2, kind: input, shape index: {}]
  %s3 = inlined_call_operand.hbm [shape: bf16[256,128], index: 3, kind: input, shape index: {}]
  %s4 = inlined_call_operand.vmem [shape: f32[1,128], index: 4, kind: input, shape index: {}]
  %s5 = inlined_call_operand.vmem [shape: bf16[20,128], index: 5, kind: output, shape index: {}]
  %s6 = sld [smem:[#allocation0]]
  $region109: #{bert_head_forward.1} parent=0
    _
  %s8 = ssub.s32 1, %s6
  %s9 = scalar_select 0, %s8, %s6
  $region1: #{bert_head_forward.1} parent=0
    #allocation2 [shape = 'u8[49152]{0}', space=vmem, size = 0xc000, scoped, tag = 'input window, operand 0']
    #allocation3 [shape = 's32[2]{0}', space=sflag, size = 0x8, scoped, tag = 'scoped memory for bert_head_forward.1']
    #allocation4 [shape = 'u8[393216]{0}', space=vmem, size = 0x60000, scoped, tag = 'input window, operand 1, single buffered']
    #allocation5 [shape = 's32[1]{0}', space=sflag, size = 0x4, scoped, tag = 'scoped memory for bert_head_forward.1']
    #allocation6 [shape = 'u8[65536]{0}', space=vmem, size = 0x10000, scoped, tag = 'input window, operand 3, single buffered']
    #allocation7 [shape = 'u8[8192]{0}', space=vmem, size = 0x2000, scoped, tag = 'output window, operand 0']
    %10 = vsyncpa [#allocation3], 0
    %s11 = scalar_lea.sflag [#allocation3], 1
    %12 = vsyncpa %s11, 0
    %13 = vsyncpa [#allocation5], 0
    loop: start=0, step=1, limit=4
    $region2: #{bert_head_forward.1} parent=1 // loop_pre_header
      _
    $region3: #{bert_head_forward.1} parent=1 // loop_header
      %s15 = sphi 0, %s19
      %p16 = scmp.ge.s32.totalorder %s15, 4
      %s25 = sphi 0, %s27
      %s28 = sphi 0, %s25
      %s29 = sphi 0, %s28
      %s45 = sphi 0, %s29
      %s49 = sphi 0, %s49
      %s51 = sphi 0, %s49
      %s52 = sphi 0, %s51
      %s66 = sphi 0, %s52
      %s70 = sphi 0, %s70
      %s72 = sphi 0, %s70
      %s73 = sphi 0, %s72
      %s87 = sphi 0, %s73
      %s91 = sphi 0, %s91
      %s93 = sphi 0, %s91
      %s94 = sphi 0, %s93
      %s108 = sphi 0, %s94
      %s112 = sphi 0, %s112
      %s114 = sphi 0, %s112
      %s115 = sphi 0, %s114
      %s129 = sphi 0, %s115
      %s135 = sphi 0, %s137
      %s138 = sphi 0, %s135
      %s139 = sphi 0, %s138
      %s155 = sphi 0, %s139
    $region4: #{bert_head_forward.1} parent=1 // loop_header_branch
      %18 = sbr.rel (%p16) target = $region8
    $region5: #{bert_head_forward.1} parent=1 // loop_body
      %s20 = ssub.s32 %s15, 1
      %s21 = ssub.s32 %s15, 2
      %s22 = sadd.s32 %s15, 1
      %s23 = ssub.s32 %s15, %s22
      %p24 = scmp.eq.s32.totalorder %s23, 0
      %s26 = sadd.s32 %s25, 1
      %s27 = scalar_select %p24, %s25, %s26
      %p30 = pneg %p24
      %p31 = scmp.eq.s32.totalorder %s15, 1
      %p32 = por %p30, %p31
      %p33 = scmp.ne.s32.totalorder %s25, %s28
      %p34 = scmp.eq.s32.totalorder %s15, 0
      %p35 = por %p33, %p34
      %p36 = scmp.ne.s32.totalorder %s25, %s28
      %p37 = scmp.eq.s32.totalorder %s20, 1
      %p38 = por %p36, %p37
      %p39 = scmp.ne.s32.totalorder %s28, %s29
      %p40 = scmp.eq.s32.totalorder %s20, 0
      %p41 = por %p39, %p40
      %p42 = scmp.ne.s32.totalorder %s28, %s29
      %p43 = scmp.eq.s32.totalorder %s21, 1
      %p44 = por %p42, %p43
      %p46 = scmp.ne.s32.totalorder %s29, %s45
      %p47 = scmp.eq.s32.totalorder %s21, 0
      %p48 = por %p46, %p47
      %s50 = sadd.s32 %s49, 1
      %p53 = scmp.eq.s32.totalorder %s15, 1
      %p54 = scmp.ne.s32.totalorder %s49, %s51
      %p55 = scmp.eq.s32.totalorder %s15, 0
      %p56 = por %p54, %p55
      %p57 = scmp.ne.s32.totalorder %s49, %s51
      %p58 = scmp.eq.s32.totalorder %s20, 1
      %p59 = por %p57, %p58
      %p60 = scmp.ne.s32.totalorder %s51, %s52
      %p61 = scmp.eq.s32.totalorder %s20, 0
      %p62 = por %p60, %p61
      %p63 = scmp.ne.s32.totalorder %s51, %s52
      %p64 = scmp.eq.s32.totalorder %s21, 1
      %p65 = por %p63, %p64
      %p67 = scmp.ne.s32.totalorder %s52, %s66
      %p68 = scmp.eq.s32.totalorder %s21, 0
      %p69 = por %p67, %p68
      %s71 = sadd.s32 %s70, 1
      %p74 = scmp.eq.s32.totalorder %s15, 1
      %p75 = scmp.ne.s32.totalorder %s70, %s72
      %p76 = scmp.eq.s32.totalorder %s15, 0
      %p77 = por %p75, %p76
      %p78 = scmp.ne.s32.totalorder %s70, %s72
      %p79 = scmp.eq.s32.totalorder %s20, 1
      %p80 = por %p78, %p79
      %p81 = scmp.ne.s32.totalorder %s72, %s73
      %p82 = scmp.eq.s32.totalorder %s20, 0
      %p83 = por %p81, %p82
      %p84 = scmp.ne.s32.totalorder %s72, %s73
      %p85 = scmp.eq.s32.totalorder %s21, 1
      %p86 = por %p84, %p85
      %p88 = scmp.ne.s32.totalorder %s73, %s87
      %p89 = scmp.eq.s32.totalorder %s21, 0
      %p90 = por %p88, %p89
      %s92 = sadd.s32 %s91, 1
      %p95 = scmp.eq.s32.totalorder %s15, 1
      %p96 = scmp.ne.s32.totalorder %s91, %s93
      %p97 = scmp.eq.s32.totalorder %s15, 0
      %p98 = por %p96, %p97
      %p99 = scmp.ne.s32.totalorder %s91, %s93
      %p100 = scmp.eq.s32.totalorder %s20, 1
      %p101 = por %p99, %p100
      %p102 = scmp.ne.s32.totalorder %s93, %s94
      %p103 = scmp.eq.s32.totalorder %s20, 0
      %p104 = por %p102, %p103
      %p105 = scmp.ne.s32.totalorder %s93, %s94
      %p106 = scmp.eq.s32.totalorder %s21, 1
      %p107 = por %p105, %p106
      %p109 = scmp.ne.s32.totalorder %s94, %s108
      %p110 = scmp.eq.s32.totalorder %s21, 0
      %p111 = por %p109, %p110
      %s113 = sadd.s32 %s112, 1
      %p116 = scmp.eq.s32.totalorder %s15, 1
      %p117 = scmp.ne.s32.totalorder %s112, %s114
      %p118 = scmp.eq.s32.totalorder %s15, 0
      %p119 = por %p117, %p118
      %p120 = scmp.ne.s32.totalorder %s112, %s114
      %p121 = scmp.eq.s32.totalorder %s20, 1
      %p122 = por %p120, %p121
      %p123 = scmp.ne.s32.totalorder %s114, %s115
      %p124 = scmp.eq.s32.totalorder %s20, 0
      %p125 = por %p123, %p124
      %p126 = scmp.ne.s32.totalorder %s114, %s115
      %p127 = scmp.eq.s32.totalorder %s21, 1
      %p128 = por %p126, %p127
      %p130 = scmp.ne.s32.totalorder %s115, %s129
      %p131 = scmp.eq.s32.totalorder %s21, 0
      %p132 = por %p130, %p131
      %s133 = ssub.s32 %s15, %s22
      %p134 = scmp.eq.s32.totalorder %s133, 0
      %s136 = sadd.s32 %s135, 1
      %s137 = scalar_select %p134, %s135, %s136
      %p140 = pneg %p134
      %p141 = scmp.eq.s32.totalorder %s15, 1
      %p142 = por %p140, %p141
      %p143 = scmp.ne.s32.totalorder %s135, %s138
      %p144 = scmp.eq.s32.totalorder %s15, 0
      %p145 = por %p143, %p144
      %p146 = scmp.ne.s32.totalorder %s135, %s138
      %p147 = scmp.eq.s32.totalorder %s20, 1
      %p148 = por %p146, %p147
      %p149 = scmp.ne.s32.totalorder %s138, %s139
      %p150 = scmp.eq.s32.totalorder %s20, 0
      %p151 = por %p149, %p150
      %p152 = scmp.ne.s32.totalorder %s138, %s139
      %p153 = scmp.eq.s32.totalorder %s21, 1
      %p154 = por %p152, %p153
      %p156 = scmp.ne.s32.totalorder %s139, %s155
      %p157 = scmp.eq.s32.totalorder %s21, 0
      %p158 = por %p156, %p157
      %p159 = scmp.le.s32.totalorder 1, %s15
      %p160 = scmp.lt.s32.totalorder %s15, 3
      %p161 = pnand %p159, %p160
      %p162 = pneg %p161
      // Predicated region
      $region9: #{bert_head_forward.1} parent=5 // pred_check
        _
      $region10: #{bert_head_forward.1} parent=5 // pred_check_branch
        %164 = sbr.rel (%p161) target = $region12
      $region11: #{bert_head_forward.1} parent=5 // pred_region
        %s165 = ssub.s32 %s15, 1
        // Predicated region
        $region13: #{bert_head_forward.1} parent=11 // pred_check
          %p166 = pneg %p62
        $region14: #{bert_head_forward.1} parent=11 // pred_check_branch
          %168 = sbr.rel (%p166) target = $region16
        $region15: #{bert_head_forward.1} parent=11 // pred_region
          %s170 = ssub.s32 12288, 12288
          %171 = vsyncadd [#allocation5], %s170
          %s172 = sshll.u32 [#allocation4], 4
          %s173 = int_to_ptr.vmem [resolvable:$true] %s172
          %178 = dma.hbm_to_vmem [thread:$0]  %s1, 12288, %s173, [#allocation5], 128, 128, 8
        $region16: #{bert_head_forward.1} parent=11 // pred_fallthru
          _
        // Predicated region
        $region17: #{bert_head_forward.1} parent=11 // pred_check
          %p179 = pneg %p83
        $region18: #{bert_head_forward.1} parent=11 // pred_check_branch
          %181 = sbr.rel (%p179) target = $region20
        $region19: #{bert_head_forward.1} parent=11 // pred_region
          _
        $region20: #{bert_head_forward.1} parent=11 // pred_fallthru
          _
        // Predicated region
        $region21: #{bert_head_forward.1} parent=11 // pred_check
          %p182 = pneg %p104
        $region22: #{bert_head_forward.1} parent=11 // pred_check_branch
          %184 = sbr.rel (%p182) target = $region24
        $region23: #{bert_head_forward.1} parent=11 // pred_region
          %s186 = ssub.s32 2048, 2048
          %187 = vsyncadd [#allocation5], %s186
          %s188 = sshll.u32 [#allocation6], 4
          %s189 = int_to_ptr.vmem [resolvable:$true] %s188
          %194 = dma.hbm_to_vmem [thread:$0]  %s3, 2048, %s189, [#allocation5], 64, 64, 4
        $region24: #{bert_head_forward.1} parent=11 // pred_fallthru
          _
        // Predicated region
        $region25: #{bert_head_forward.1} parent=11 // pred_check
          %p195 = pneg %p125
        $region26: #{bert_head_forward.1} parent=11 // pred_check_branch
          %197 = sbr.rel (%p195) target = $region28
        $region27: #{bert_head_forward.1} parent=11 // pred_region
          _
        $region28: #{bert_head_forward.1} parent=11 // pred_fallthru
          _
      $region12: #{bert_head_forward.1} parent=5 // pred_fallthru
        _
      %p198 = scmp.lt.s32.totalorder %s15, 2
      // Predicated region
      $region29: #{bert_head_forward.1} parent=5 // pred_check
        %p199 = pneg %p198
      $region30: #{bert_head_forward.1} parent=5 // pred_check_branch
        %201 = sbr.rel (%p199) target = $region32
      $region31: #{bert_head_forward.1} parent=5 // pred_region
        // Predicated region
        $region33: #{bert_head_forward.1} parent=31 // pred_check
          %p202 = pneg %p35
        $region34: #{bert_head_forward.1} parent=31 // pred_check_branch
          %204 = sbr.rel (%p202) target = $region36
        $region35: #{bert_head_forward.1} parent=31 // pred_region
          %s205 = sand.u32 %s25, 1
          %s206 = scalar_lea.sflag [#allocation3], %s205
          %s207 = sand.u32 %s25, 1
          %s208 = smul.addr %s207, 48
          %s209 = scalar_lea.vmem [#allocation2], %s208
          %s210 = smul.u32 2, %s15
          %s211 = ssub.s32 3, %s210
          %p212 = scmp.lt.s32.totalorder %s211, 2
          %s213 = scalar_select %p212, %s211, 2
          %s214 = smul.u32 64, %s213
          %s215 = smul.u32 %s214, 6
          %s217 = ssub.s32 768, %s215
          %218 = vsyncadd %s206, %s217
          %p219 = scmp.ne.s32.totalorder 0, %s215
          %s220 = smul.addr %s210, 6
          %s221 = smul.addr %s220, 64
          %s222 = scalar_lea.hbm %s0, %s221
          %s223 = smul.u32 24, %s213
          %s224 = sshll.u32 %s209, 4
          %s225 = int_to_ptr.vmem [resolvable:$true] %s224
          %s226 = sshll.u32 %s223, 4
          %230 = dma.hbm_to_vmem [thread:$0]  (%p219), %s222, %s226, %s225, %s206, 384, 384, 24
        $region36: #{bert_head_forward.1} parent=31 // pred_fallthru
          _
      $region32: #{bert_head_forward.1} parent=5 // pred_fallthru
        _
      %p231 = scmp.le.s32.totalorder 1, %s15
      %p232 = scmp.lt.s32.totalorder %s15, 3
      %p233 = pnand %p231, %p232
      %p234 = pneg %p233
      // Predicated region
      $region37: #{bert_head_forward.1} parent=5 // pred_check
        _
      $region38: #{bert_head_forward.1} parent=5 // pred_check_branch
        %236 = sbr.rel (%p233) target = $region40
      $region39: #{bert_head_forward.1} parent=5 // pred_region
        %s237 = ssub.s32 %s15, 1
        %s238 = sand.u32 %s28, 1
        %s239 = scalar_lea.sflag [#allocation3], %s238
        %s240 = sand.u32 %s28, 1
        %s241 = smul.addr %s240, 48
        %s242 = scalar_lea.vmem [#allocation2], %s241
        // Predicated region
        $region41: #{bert_head_forward.1} parent=39 // pred_check
          %p243 = pneg %p41
        $region42: #{bert_head_forward.1} parent=39 // pred_check_branch
          %245 = sbr.rel (%p243) target = $region44
        $region43: #{bert_head_forward.1} parent=39 // pred_region
          %246 = dma.done %s239, 768
        $region44: #{bert_head_forward.1} parent=39 // pred_fallthru
          _
        // Predicated region
        $region45: #{bert_head_forward.1} parent=39 // pred_check
          %p247 = pneg %p62
        $region46: #{bert_head_forward.1} parent=39 // pred_check_branch
          %249 = sbr.rel (%p247) target = $region48
        $region47: #{bert_head_forward.1} parent=39 // pred_region
          %250 = dma.done [#allocation5], 12288
        $region48: #{bert_head_forward.1} parent=39 // pred_fallthru
          _
        // Predicated region
        $region49: #{bert_head_forward.1} parent=39 // pred_check
          %p251 = pneg %p104
        $region50: #{bert_head_forward.1} parent=39 // pred_check_branch
          %253 = sbr.rel (%p251) target = $region52
        $region51: #{bert_head_forward.1} parent=39 // pred_region
          %254 = dma.done [#allocation5], 2048
        $region52: #{bert_head_forward.1} parent=39 // pred_fallthru
          _
        %s255 = sand.u32 %s28, 1
        %s256 = scalar_lea.sflag [#allocation3], %s255
        %s257 = sand.u32 %s28, 1
        %s258 = smul.addr %s257, 48
        %s259 = scalar_lea.vmem [#allocation2], %s258
        %p260 = pneg %p41
        %p261 = pneg %p38
        %p262 = pneg %p62
        %p263 = pneg %p59
        %p264 = pneg %p83
        %p265 = pneg %p80
        %p266 = pneg %p104
        %p267 = pneg %p101
        %p268 = pneg %p125
        %p269 = pneg %p122
        %p270 = pneg %p151
        %p271 = pneg %p148
        %s272 = sand.u32 %s138, 1
        %s273 = sand.u32 %s138, 1
        %s274 = smul.addr %s273, 8
        %s275 = scalar_lea.vmem [#allocation7], %s274
        %s276 = smul.u32 2, %s20
        %s277 = ssub.s32 3, %s276
        %p278 = scmp.lt.s32.totalorder %s277, 2
        %s279 = scalar_select %p278, %s277, 2
        %s280 = smul.u32 64, %s279
        %s281 = smul.u32 %s280, 6
        %s282 = smul.u32 2, %s20
        %s283 = ssub.s32 3, %s282
        %p284 = scmp.lt.s32.totalorder %s283, 2
        %s285 = scalar_select %p284, %s283, 2
        %s286 = smul.u32 64, %s285
        %v288 = vld [vmem:[%s242] sm:$0xff]
        %v289 = vld [vmem:[%s242 + $0x8] sm:$0xff]
        %v290 = vld [vmem:[%s242 + $0x10] sm:$0xff]
        %v291 = vld [vmem:[%s242 + $0x18] sm:$0xff]
        %v292 = vld [vmem:[%s242 + $0x20] sm:$0xff]
        %v293 = vld [vmem:[%s242 + $0x28] sm:$0xff]
        %v294 = vunpack.c.l.bf16 %v288
        %v295 = vunpack.c.h.bf16 %v288
        %v296 = vunpack.c.l.bf16 %v289
        %v297 = vunpack.c.h.bf16 %v289
        %v298 = vunpack.c.l.bf16 %v290
        %v299 = vunpack.c.h.bf16 %v290
        %v300 = vunpack.c.l.bf16 %v291
        %v301 = vunpack.c.h.bf16 %v291
        %v302 = vunpack.c.l.bf16 %v292
        %v303 = vunpack.c.h.bf16 %v292
        %v304 = vunpack.c.l.bf16 %v293
        %v305 = vunpack.c.h.bf16 %v293
        %v306 = vadd.f32 %v294, %v295
        %v307 = vadd.f32 %v306, %v296
        %v308 = vadd.f32 %v307, %v297
        %v309 = vadd.f32 %v308, %v298
        %v310 = vadd.f32 %v309, %v299
        %311 = vadd.xlane.f32.xlu0 %v310
        %v312 = vpop.xlane.xlu0 %311
        %v313 = vadd.f32 %v300, %v301
        %v314 = vadd.f32 %v313, %v302
        %v315 = vadd.f32 %v314, %v303
        %v316 = vadd.f32 %v315, %v304
        %v317 = vadd.f32 %v316, %v305
        %318 = vadd.xlane.f32.xlu0 %v317
        %v319 = vpop.xlane.xlu0 %318
        %v320 = vmul.f32 %v312, 0.0013020834
        %v321 = vmul.f32 %v319, 0.0013020834
        %v322 = vmul.f32 %v294, %v294
        %v323 = vmul.f32 %v295, %v295
        %v324 = vmul.f32 %v296, %v296
        %v325 = vmul.f32 %v297, %v297
        %v326 = vmul.f32 %v298, %v298
        %v327 = vmul.f32 %v299, %v299
        %v328 = vmul.f32 %v300, %v300
        %v329 = vmul.f32 %v301, %v301
        %v330 = vmul.f32 %v302, %v302
        %v331 = vmul.f32 %v303, %v303
        %v332 = vmul.f32 %v304, %v304
        %v333 = vmul.f32 %v305, %v305
        %v334 = vadd.f32 %v322, %v323
        %v335 = vadd.f32 %v334, %v324
        %v336 = vadd.f32 %v335, %v325
        %v337 = vadd.f32 %v336, %v326
        %v338 = vadd.f32 %v337, %v327
        %339 = vadd.xlane.f32.xlu0 %v338
        %v340 = vpop.xlane.xlu0 %339
        %v341 = vadd.f32 %v328, %v329
        %v342 = vadd.f32 %v341, %v330
        %v343 = vadd.f32 %v342, %v331
        %v344 = vadd.f32 %v343, %v332
        %v345 = vadd.f32 %v344, %v333
        %346 = vadd.xlane.f32.xlu0 %v345
        %v347 = vpop.xlane.xlu0 %346
        %v348 = vmul.f32 %v340, 0.0013020834
        %v349 = vmul.f32 %v347, 0.0013020834
        %v350 = vmul.f32 %v320, %v320
        %v351 = vmul.f32 %v321, %v321
        %v352 = vsub.f32 %v348, %v350
        %v353 = vsub.f32 %v349, %v351
        %v354 = vsub.f32 %v294, %v320
        %v355 = vsub.f32 %v295, %v320
        %v356 = vsub.f32 %v296, %v320
        %v357 = vsub.f32 %v297, %v320
        %v358 = vsub.f32 %v298, %v320
        %v359 = vsub.f32 %v299, %v320
        %v360 = vsub.f32 %v300, %v321
        %v361 = vsub.f32 %v301, %v321
        %v362 = vsub.f32 %v302, %v321
        %v363 = vsub.f32 %v303, %v321
        %v364 = vsub.f32 %v304, %v321
        %v365 = vsub.f32 %v305, %v321
        %v366 = vadd.f32 %v352, 1e-05
        %v367 = vadd.f32 %v353, 1e-05
        %v368 = vrsqrt.pop %v366
        %v369 = vrsqrt.pop %v367
        %v370 = vmul.f32 %v354, %v368
        %v371 = vmul.f32 %v355, %v368
        %v372 = vmul.f32 %v356, %v368
        %v373 = vmul.f32 %v357, %v368
        %v374 = vmul.f32 %v358, %v368
        %v375 = vmul.f32 %v359, %v368
        %v376 = vmul.f32 %v360, %v369
        %v377 = vmul.f32 %v361, %v369
        %v378 = vmul.f32 %v362, %v369
        %v379 = vmul.f32 %v363, %v369
        %v380 = vmul.f32 %v364, %v369
        %v381 = vmul.f32 %v365, %v369
        %v382 = vpack.c.bf16 %v376, %v370
        %v383 = vpack.c.bf16 %v377, %v371
        %v384 = vpack.c.bf16 %v378, %v372
        %v385 = vpack.c.bf16 %v379, %v373
        %v386 = vpack.c.bf16 %v380, %v374
        %v387 = vpack.c.bf16 %v381, %v375
        %v388 = vld [vmem:[#allocation4] sm:$0xff]
        %v389 = vld [vmem:[#allocation4 + $0x8] sm:$0xff]
        %v390 = vld [vmem:[#allocation4 + $0x10] sm:$0xff]
        %v391 = vld [vmem:[#allocation4 + $0x18] sm:$0xff]
        %v392 = vld [vmem:[#allocation4 + $0x20] sm:$0xff]
        %v393 = vld [vmem:[#allocation4 + $0x28] sm:$0xff]
        %v394 = vld [vmem:[#allocation4 + $0x30] sm:$0xff]
        %v395 = vld [vmem:[#allocation4 + $0x38] sm:$0xff]
        %v396 = vld [vmem:[#allocation4 + $0x40] sm:$0xff]
        %v397 = vld [vmem:[#allocation4 + $0x48] sm:$0xff]
        %v398 = vld [vmem:[#allocation4 + $0x50] sm:$0xff]
        %v399 = vld [vmem:[#allocation4 + $0x58] sm:$0xff]
        %v400 = vld [vmem:[#allocation4 + $0x60] sm:$0xff]
        %v401 = vld [vmem:[#allocation4 + $0x68] sm:$0xff]
        %v402 = vld [vmem:[#allocation4 + $0x70] sm:$0xff]
        %v403 = vld [vmem:[#allocation4 + $0x78] sm:$0xff]
        %v404 = vld [vmem:[#allocation4 + $0x80] sm:$0xff]
        %v405 = vld [vmem:[#allocation4 + $0x88] sm:$0xff]
        %v406 = vld [vmem:[#allocation4 + $0x90] sm:$0xff]
        %v407 = vld [vmem:[#allocation4 + $0x98] sm:$0xff]
        %v408 = vld [vmem:[#allocation4 + $0xa0] sm:$0xff]
        %v409 = vld [vmem:[#allocation4 + $0xa8] sm:$0xff]
        %v410 = vld [vmem:[#allocation4 + $0xb0] sm:$0xff]
        %v411 = vld [vmem:[#allocation4 + $0xb8] sm:$0xff]
        %v412 = vld [vmem:[#allocation4 + $0xc0] sm:$0xff]
        %v413 = vld [vmem:[#allocation4 + $0xc8] sm:$0xff]
        %v414 = vld [vmem:[#allocation4 + $0xd0] sm:$0xff]
        %v415 = vld [vmem:[#allocation4 + $0xd8] sm:$0xff]
        %v416 = vld [vmem:[#allocation4 + $0xe0] sm:$0xff]
        %v417 = vld [vmem:[#allocation4 + $0xe8] sm:$0xff]
        %v418 = vld [vmem:[#allocation4 + $0xf0] sm:$0xff]
        %v419 = vld [vmem:[#allocation4 + $0xf8] sm:$0xff]
        %v420 = vld [vmem:[#allocation4 + $0x100] sm:$0xff]
        %v421 = vld [vmem:[#allocation4 + $0x108] sm:$0xff]
        %v422 = vld [vmem:[#allocation4 + $0x110] sm:$0xff]
        %v423 = vld [vmem:[#allocation4 + $0x118] sm:$0xff]
        %v424 = vld [vmem:[#allocation4 + $0x120] sm:$0xff]
        %v425 = vld [vmem:[#allocation4 + $0x128] sm:$0xff]
        %v426 = vld [vmem:[#allocation4 + $0x130] sm:$0xff]
        %v427 = vld [vmem:[#allocation4 + $0x138] sm:$0xff]
        %v428 = vld [vmem:[#allocation4 + $0x140] sm:$0xff]
        %v429 = vld [vmem:[#allocation4 + $0x148] sm:$0xff]
        %v430 = vld [vmem:[#allocation4 + $0x150] sm:$0xff]
        %v431 = vld [vmem:[#allocation4 + $0x158] sm:$0xff]
        %v432 = vld [vmem:[#allocation4 + $0x160] sm:$0xff]
        %v433 = vld [vmem:[#allocation4 + $0x168] sm:$0xff]
        %v434 = vld [vmem:[#allocation4 + $0x170] sm:$0xff]
        %v435 = vld [vmem:[#allocation4 + $0x178] sm:$0xff]
        %v436 = vld [vmem:[#allocation4 + $0x180] sm:$0xff]
        %v437 = vld [vmem:[#allocation4 + $0x188] sm:$0xff]
        %v438 = vld [vmem:[#allocation4 + $0x190] sm:$0xff]
        %v439 = vld [vmem:[#allocation4 + $0x198] sm:$0xff]
        %v440 = vld [vmem:[#allocation4 + $0x1a0] sm:$0xff]
        %v441 = vld [vmem:[#allocation4 + $0x1a8] sm:$0xff]
        %v442 = vld [vmem:[#allocation4 + $0x1b0] sm:$0xff]
        %v443 = vld [vmem:[#allocation4 + $0x1b8] sm:$0xff]
        %v444 = vld [vmem:[#allocation4 + $0x1c0] sm:$0xff]
        %v445 = vld [vmem:[#allocation4 + $0x1c8] sm:$0xff]
        %v446 = vld [vmem:[#allocation4 + $0x1d0] sm:$0xff]
        %v447 = vld [vmem:[#allocation4 + $0x1d8] sm:$0xff]
        %v448 = vld [vmem:[#allocation4 + $0x1e0] sm:$0xff]
        %v449 = vld [vmem:[#allocation4 + $0x1e8] sm:$0xff]
        %v450 = vld [vmem:[#allocation4 + $0x1f0] sm:$0xff]
        %v451 = vld [vmem:[#allocation4 + $0x1f8] sm:$0xff]
        %v452 = vld [vmem:[#allocation4 + $0x200] sm:$0xff]
        %v453 = vld [vmem:[#allocation4 + $0x208] sm:$0xff]
        %v454 = vld [vmem:[#allocation4 + $0x210] sm:$0xff]
        %v455 = vld [vmem:[#allocation4 + $0x218] sm:$0xff]
        %v456 = vld [vmem:[#allocation4 + $0x220] sm:$0xff]
        %v457 = vld [vmem:[#allocation4 + $0x228] sm:$0xff]
        %v458 = vld [vmem:[#allocation4 + $0x230] sm:$0xff]
        %v459 = vld [vmem:[#allocation4 + $0x238] sm:$0xff]
        %v460 = vld [vmem:[#allocation4 + $0x240] sm:$0xff]
        %v461 = vld [vmem:[#allocation4 + $0x248] sm:$0xff]
        %v462 = vld [vmem:[#allocation4 + $0x250] sm:$0xff]
        %v463 = vld [vmem:[#allocation4 + $0x258] sm:$0xff]
        %v464 = vld [vmem:[#allocation4 + $0x260] sm:$0xff]
        %v465 = vld [vmem:[#allocation4 + $0x268] sm:$0xff]
        %v466 = vld [vmem:[#allocation4 + $0x270] sm:$0xff]
        %v467 = vld [vmem:[#allocation4 + $0x278] sm:$0xff]
        %v468 = vld [vmem:[#allocation4 + $0x280] sm:$0xff]
        %v469 = vld [vmem:[#allocation4 + $0x288] sm:$0xff]
        %v470 = vld [vmem:[#allocation4 + $0x290] sm:$0xff]
        %v471 = vld [vmem:[#allocation4 + $0x298] sm:$0xff]
        %v472 = vld [vmem:[#allocation4 + $0x2a0] sm:$0xff]
        %v473 = vld [vmem:[#allocation4 + $0x2a8] sm:$0xff]
        %v474 = vld [vmem:[#allocation4 + $0x2b0] sm:$0xff]
        %v475 = vld [vmem:[#allocation4 + $0x2b8] sm:$0xff]
        %v476 = vld [vmem:[#allocation4 + $0x2c0] sm:$0xff]
        %v477 = vld [vmem:[#allocation4 + $0x2c8] sm:$0xff]
        %v478 = vld [vmem:[#allocation4 + $0x2d0] sm:$0xff]
        %v479 = vld [vmem:[#allocation4 + $0x2d8] sm:$0xff]
        %v480 = vld [vmem:[#allocation4 + $0x2e0] sm:$0xff]
        %v481 = vld [vmem:[#allocation4 + $0x2e8] sm:$0xff]
        %v482 = vld [vmem:[#allocation4 + $0x2f0] sm:$0xff]
        %v483 = vld [vmem:[#allocation4 + $0x2f8] sm:$0xff]
        %v484 = vld [vmem:[%s2] sm:$0x3]
        %v486 = vlaneseq
        %v487 = vshrl.u32 %v486, 7
        %v488 = vsub.s32 0, %v487
        %v489 = vrot.slane %v484, %v488
        %v490 = vlaneseq
        %v491 = vshrl.u32 %v490, 7
        %v492 = vsub.s32 1, %v491
        %v493 = vrot.slane %v484, %v492
        %v592 = vunpack.c.l.b16 %v388
        %v593 = vunpack.c.h.b16 %v388
        %v594 = vunpack.c.l.b16 %v389
        %v595 = vunpack.c.h.b16 %v389
        %v596 = vunpack.c.l.b16 %v390
        %v597 = vunpack.c.h.b16 %v390
        %v598 = vunpack.c.l.b16 %v391
        %v599 = vunpack.c.h.b16 %v391
        %v600 = vunpack.c.l.b16 %v392
        %v601 = vunpack.c.h.b16 %v392
        %v602 = vunpack.c.l.b16 %v393
        %v603 = vunpack.c.h.b16 %v393
        %v604 = vunpack.c.l.b16 %v394
        %v605 = vunpack.c.h.b16 %v394
        %v606 = vunpack.c.l.b16 %v395
        %v607 = vunpack.c.h.b16 %v395
        %v608 = vunpack.c.l.b16 %v396
        %v609 = vunpack.c.h.b16 %v396
        %v610 = vunpack.c.l.b16 %v397
        %v611 = vunpack.c.h.b16 %v397
        %v612 = vunpack.c.l.b16 %v398
        %v613 = vunpack.c.h.b16 %v398
        %v614 = vunpack.c.l.b16 %v399
        %v615 = vunpack.c.h.b16 %v399
        %v616 = vunpack.c.l.b16 %v400
        %v617 = vunpack.c.h.b16 %v400
        %v618 = vunpack.c.l.b16 %v401
        %v619 = vunpack.c.h.b16 %v401
        %v620 = vunpack.c.l.b16 %v402
        %v621 = vunpack.c.h.b16 %v402
        %v622 = vunpack.c.l.b16 %v403
        %v623 = vunpack.c.h.b16 %v403
        %v624 = vunpack.c.l.b16 %v404
        %v625 = vunpack.c.h.b16 %v404
        %v626 = vunpack.c.l.b16 %v405
        %v627 = vunpack.c.h.b16 %v405
        %v628 = vunpack.c.l.b16 %v406
        %v629 = vunpack.c.h.b16 %v406
        %v630 = vunpack.c.l.b16 %v407
        %v631 = vunpack.c.h.b16 %v407
        %v632 = vunpack.c.l.b16 %v408
        %v633 = vunpack.c.h.b16 %v408
        %v634 = vunpack.c.l.b16 %v409
        %v635 = vunpack.c.h.b16 %v409
        %v636 = vunpack.c.l.b16 %v410
        %v637 = vunpack.c.h.b16 %v410
        %v638 = vunpack.c.l.b16 %v411
        %v639 = vunpack.c.h.b16 %v411
        %v640 = vunpack.c.l.b16 %v412
        %v641 = vunpack.c.h.b16 %v412
        %v642 = vunpack.c.l.b16 %v413
        %v643 = vunpack.c.h.b16 %v413
        %v644 = vunpack.c.l.b16 %v414
        %v645 = vunpack.c.h.b16 %v414
        %v646 = vunpack.c.l.b16 %v415
        %v647 = vunpack.c.h.b16 %v415
        %v648 = vunpack.c.l.b16 %v416
        %v649 = vunpack.c.h.b16 %v416
        %v650 = vunpack.c.l.b16 %v417
        %v651 = vunpack.c.h.b16 %v417
        %v652 = vunpack.c.l.b16 %v418
        %v653 = vunpack.c.h.b16 %v418
        %v654 = vunpack.c.l.b16 %v419
        %v655 = vunpack.c.h.b16 %v419
        %v656 = vunpack.c.l.b16 %v420
        %v657 = vunpack.c.h.b16 %v420
        %v658 = vunpack.c.l.b16 %v421
        %v659 = vunpack.c.h.b16 %v421
        %v660 = vunpack.c.l.b16 %v422
        %v661 = vunpack.c.h.b16 %v422
        %v662 = vunpack.c.l.b16 %v423
        %v663 = vunpack.c.h.b16 %v423
        %v664 = vunpack.c.l.b16 %v424
        %v665 = vunpack.c.h.b16 %v424
        %v666 = vunpack.c.l.b16 %v425
        %v667 = vunpack.c.h.b16 %v425
        %v668 = vunpack.c.l.b16 %v426
        %v669 = vunpack.c.h.b16 %v426
        %v670 = vunpack.c.l.b16 %v427
        %v671 = vunpack.c.h.b16 %v427
        %v672 = vunpack.c.l.b16 %v428
        %v673 = vunpack.c.h.b16 %v428
        %v674 = vunpack.c.l.b16 %v429
        %v675 = vunpack.c.h.b16 %v429
        %v676 = vunpack.c.l.b16 %v430
        %v677 = vunpack.c.h.b16 %v430
        %v678 = vunpack.c.l.b16 %v431
        %v679 = vunpack.c.h.b16 %v431
        %v680 = vunpack.c.l.b16 %v432
        %v681 = vunpack.c.h.b16 %v432
        %v682 = vunpack.c.l.b16 %v433
        %v683 = vunpack.c.h.b16 %v433
        %v684 = vunpack.c.l.b16 %v434
        %v685 = vunpack.c.h.b16 %v434
        %v686 = vunpack.c.l.b16 %v435
        %v687 = vunpack.c.h.b16 %v435
        %v688 = vunpack.c.l.b16 %v436
        %v689 = vunpack.c.h.b16 %v436
        %v690 = vunpack.c.l.b16 %v437
        %v691 = vunpack.c.h.b16 %v437
        %v692 = vunpack.c.l.b16 %v438
        %v693 = vunpack.c.h.b16 %v438
        %v694 = vunpack.c.l.b16 %v439
        %v695 = vunpack.c.h.b16 %v439
        %v696 = vunpack.c.l.b16 %v440
        %v697 = vunpack.c.h.b16 %v440
        %v698 = vunpack.c.l.b16 %v441
        %v699 = vunpack.c.h.b16 %v441
        %v700 = vunpack.c.l.b16 %v442
        %v701 = vunpack.c.h.b16 %v442
        %v702 = vunpack.c.l.b16 %v443
        %v703 = vunpack.c.h.b16 %v443
        %v704 = vunpack.c.l.b16 %v444
        %v705 = vunpack.c.h.b16 %v444
        %v706 = vunpack.c.l.b16 %v445
        %v707 = vunpack.c.h.b16 %v445
        %v708 = vunpack.c.l.b16 %v446
        %v709 = vunpack.c.h.b16 %v446
        %v710 = vunpack.c.l.b16 %v447
        %v711 = vunpack.c.h.b16 %v447
        %v712 = vunpack.c.l.b16 %v448
        %v713 = vunpack.c.h.b16 %v448
        %v714 = vunpack.c.l.b16 %v449
        %v715 = vunpack.c.h.b16 %v449
        %v716 = vunpack.c.l.b16 %v450
        %v717 = vunpack.c.h.b16 %v450
        %v718 = vunpack.c.l.b16 %v451
        %v719 = vunpack.c.h.b16 %v451
        %v720 = vunpack.c.l.b16 %v452
        %v721 = vunpack.c.h.b16 %v452
        %v722 = vunpack.c.l.b16 %v453
        %v723 = vunpack.c.h.b16 %v453
        %v724 = vunpack.c.l.b16 %v454
        %v725 = vunpack.c.h.b16 %v454
        %v726 = vunpack.c.l.b16 %v455
        %v727 = vunpack.c.h.b16 %v455
        %v728 = vunpack.c.l.b16 %v456
        %v729 = vunpack.c.h.b16 %v456
        %v730 = vunpack.c.l.b16 %v457
        %v731 = vunpack.c.h.b16 %v457
        %v732 = vunpack.c.l.b16 %v458
        %v733 = vunpack.c.h.b16 %v458
        %v734 = vunpack.c.l.b16 %v459
        %v735 = vunpack.c.h.b16 %v459
        %v736 = vunpack.c.l.b16 %v460
        %v737 = vunpack.c.h.b16 %v460
        %v738 = vunpack.c.l.b16 %v461
        %v739 = vunpack.c.h.b16 %v461
        %v740 = vunpack.c.l.b16 %v462
        %v741 = vunpack.c.h.b16 %v462
        %v742 = vunpack.c.l.b16 %v463
        %v743 = vunpack.c.h.b16 %v463
        %v744 = vunpack.c.l.b16 %v464
        %v745 = vunpack.c.h.b16 %v464
        %v746 = vunpack.c.l.b16 %v465
        %v747 = vunpack.c.h.b16 %v465
        %v748 = vunpack.c.l.b16 %v466
        %v749 = vunpack.c.h.b16 %v466
        %v750 = vunpack.c.l.b16 %v467
        %v751 = vunpack.c.h.b16 %v467
        %v752 = vunpack.c.l.b16 %v468
        %v753 = vunpack.c.h.b16 %v468
        %v754 = vunpack.c.l.b16 %v469
        %v755 = vunpack.c.h.b16 %v469
        %v756 = vunpack.c.l.b16 %v470
        %v757 = vunpack.c.h.b16 %v470
        %v758 = vunpack.c.l.b16 %v471
        %v759 = vunpack.c.h.b16 %v471
        %v760 = vunpack.c.l.b16 %v472
        %v761 = vunpack.c.h.b16 %v472
        %v762 = vunpack.c.l.b16 %v473
        %v763 = vunpack.c.h.b16 %v473
        %v764 = vunpack.c.l.b16 %v474
        %v765 = vunpack.c.h.b16 %v474
        %v766 = vunpack.c.l.b16 %v475
        %v767 = vunpack.c.h.b16 %v475
        %v768 = vunpack.c.l.b16 %v476
        %v769 = vunpack.c.h.b16 %v476
        %v770 = vunpack.c.l.b16 %v477
        %v771 = vunpack.c.h.b16 %v477
        %v772 = vunpack.c.l.b16 %v478
        %v773 = vunpack.c.h.b16 %v478
        %v774 = vunpack.c.l.b16 %v479
        %v775 = vunpack.c.h.b16 %v479
        %v776 = vunpack.c.l.b16 %v480
        %v777 = vunpack.c.h.b16 %v480
        %v778 = vunpack.c.l.b16 %v481
        %v779 = vunpack.c.h.b16 %v481
        %v780 = vunpack.c.l.b16 %v482
        %v781 = vunpack.c.h.b16 %v482
        %v782 = vunpack.c.l.b16 %v483
        %v783 = vunpack.c.h.b16 %v483
        %v784 = vpack.c.b16 %v594, %v592
        %v785 = vpack.c.b16 %v595, %v593
        %v786 = vpack.c.b16 %v598, %v596
        %v787 = vpack.c.b16 %v599, %v597
        %v788 = vpack.c.b16 %v602, %v600
        %v789 = vpack.c.b16 %v603, %v601
        %v790 = vpack.c.b16 %v606, %v604
        %v791 = vpack.c.b16 %v607, %v605
        %v792 = vpack.c.b16 %v610, %v608
        %v793 = vpack.c.b16 %v611, %v609
        %v794 = vpack.c.b16 %v614, %v612
        %v795 = vpack.c.b16 %v615, %v613
        %v796 = vpack.c.b16 %v618, %v616
        %v797 = vpack.c.b16 %v619, %v617
        %v798 = vpack.c.b16 %v622, %v620
        %v799 = vpack.c.b16 %v623, %v621
        %v800 = vpack.c.b16 %v626, %v624
        %v801 = vpack.c.b16 %v627, %v625
        %v802 = vpack.c.b16 %v630, %v628
        %v803 = vpack.c.b16 %v631, %v629
        %v804 = vpack.c.b16 %v634, %v632
        %v805 = vpack.c.b16 %v635, %v633
        %v806 = vpack.c.b16 %v638, %v636
        %v807 = vpack.c.b16 %v639, %v637
        %v808 = vpack.c.b16 %v642, %v640
        %v809 = vpack.c.b16 %v643, %v641
        %v810 = vpack.c.b16 %v646, %v644
        %v811 = vpack.c.b16 %v647, %v645
        %v812 = vpack.c.b16 %v650, %v648
        %v813 = vpack.c.b16 %v651, %v649
        %v814 = vpack.c.b16 %v654, %v652
        %v815 = vpack.c.b16 %v655, %v653
        %v816 = vpack.c.b16 %v658, %v656
        %v817 = vpack.c.b16 %v659, %v657
        %v818 = vpack.c.b16 %v662, %v660
        %v819 = vpack.c.b16 %v663, %v661
        %v820 = vpack.c.b16 %v666, %v664
        %v821 = vpack.c.b16 %v667, %v665
        %v822 = vpack.c.b16 %v670, %v668
        %v823 = vpack.c.b16 %v671, %v669
        %v824 = vpack.c.b16 %v674, %v672
        %v825 = vpack.c.b16 %v675, %v673
        %v826 = vpack.c.b16 %v678, %v676
        %v827 = vpack.c.b16 %v679, %v677
        %v828 = vpack.c.b16 %v682, %v680
        %v829 = vpack.c.b16 %v683, %v681
        %v830 = vpack.c.b16 %v686, %v684
        %v831 = vpack.c.b16 %v687, %v685
        %v832 = vpack.c.b16 %v690, %v688
        %v833 = vpack.c.b16 %v691, %v689
        %v834 = vpack.c.b16 %v694, %v692
        %v835 = vpack.c.b16 %v695, %v693
        %v836 = vpack.c.b16 %v698, %v696
        %v837 = vpack.c.b16 %v699, %v697
        %v838 = vpack.c.b16 %v702, %v700
        %v839 = vpack.c.b16 %v703, %v701
        %v840 = vpack.c.b16 %v706, %v704
        %v841 = vpack.c.b16 %v707, %v705
        %v842 = vpack.c.b16 %v710, %v708
        %v843 = vpack.c.b16 %v711, %v709
        %v844 = vpack.c.b16 %v714, %v712
        %v845 = vpack.c.b16 %v715, %v713
        %v846 = vpack.c.b16 %v718, %v716
        %v847 = vpack.c.b16 %v719, %v717
        %v848 = vpack.c.b16 %v722, %v720
        %v849 = vpack.c.b16 %v723, %v721
        %v850 = vpack.c.b16 %v726, %v724
        %v851 = vpack.c.b16 %v727, %v725
        %v852 = vpack.c.b16 %v730, %v728
        %v853 = vpack.c.b16 %v731, %v729
        %v854 = vpack.c.b16 %v734, %v732
        %v855 = vpack.c.b16 %v735, %v733
        %v856 = vpack.c.b16 %v738, %v736
        %v857 = vpack.c.b16 %v739, %v737
        %v858 = vpack.c.b16 %v742, %v740
        %v859 = vpack.c.b16 %v743, %v741
        %v860 = vpack.c.b16 %v746, %v744
        %v861 = vpack.c.b16 %v747, %v745
        %v862 = vpack.c.b16 %v750, %v748
        %v863 = vpack.c.b16 %v751, %v749
        %v864 = vpack.c.b16 %v754, %v752
        %v865 = vpack.c.b16 %v755, %v753
        %v866 = vpack.c.b16 %v758, %v756
        %v867 = vpack.c.b16 %v759, %v757
        %v868 = vpack.c.b16 %v762, %v760
        %v869 = vpack.c.b16 %v763, %v761
        %v870 = vpack.c.b16 %v766, %v764
        %v871 = vpack.c.b16 %v767, %v765
        %v872 = vpack.c.b16 %v770, %v768
        %v873 = vpack.c.b16 %v771, %v769
        %v874 = vpack.c.b16 %v774, %v772
        %v875 = vpack.c.b16 %v775, %v773
        %v876 = vpack.c.b16 %v778, %v776
        %v877 = vpack.c.b16 %v779, %v777
        %v878 = vpack.c.b16 %v782, %v780
        %v879 = vpack.c.b16 %v783, %v781
        %976 = vmatprep.subr.bf16.mxu0 %v785
        %977 = vmatpush1.bf16.msra.mxu0 %v784
        %978 = vmatprep.subr.bf16.mxu0 %v787
        %979 = vmatpush1.bf16.msra.mxu0 %v786
        %980 = vmatprep.subr.bf16.mxu0 %v789
        %981 = vmatpush1.bf16.msra.mxu0 %v788
        %982 = vmatprep.subr.bf16.mxu0 %v791
        %983 = vmatpush1.bf16.msra.mxu0 %v790
        %984 = vmatprep.subr.bf16.mxu0 %v793
        %985 = vmatpush1.bf16.msra.mxu0 %v792
        %986 = vmatprep.subr.bf16.mxu0 %v795
        %987 = vmatpush1.bf16.msra.mxu0 %v794
        %988 = vmatprep.subr.bf16.mxu0 %v797
        %989 = vmatpush1.bf16.msra.mxu0 %v796
        %990 = vmatprep.subr.bf16.mxu0 %v799
        %991 = vmatpush1.bf16.msra.mxu0 %v798
        %992 = vmatprep.subr.bf16.mxu0 %v801
        %993 = vmatpush1.bf16.msra.mxu0 %v800
        %994 = vmatprep.subr.bf16.mxu0 %v803
        %995 = vmatpush1.bf16.msra.mxu0 %v802
        %996 = vmatprep.subr.bf16.mxu0 %v805
        %997 = vmatpush1.bf16.msra.mxu0 %v804
        %998 = vmatprep.subr.bf16.mxu0 %v807
        %999 = vmatpush1.bf16.msra.mxu0 %v806
        %1000 = vmatprep.subr.bf16.mxu0 %v809
        %1001 = vmatpush1.bf16.msra.mxu0 %v808
        %1002 = vmatprep.subr.bf16.mxu0 %v811
        %1003 = vmatpush1.bf16.msra.mxu0 %v810
        %1004 = vmatprep.subr.bf16.mxu0 %v813
        %1005 = vmatpush1.bf16.msra.mxu0 %v812
        %1006 = vmatprep.subr.bf16.mxu0 %v815
        %1007 = vmatpush1.bf16.msra.mxu0 %v814
        %1008 = vmatprep.mubr.bf16.mxu0 %v383
        %1009 = vmatmul.mubr.bf16.gmra.mrb[0].mxu0 %v382
        %v1010 = vpop.f32.mrb[0].mxu0
        %v1011 = vadd.f32 %v489, %v1010
        %v1012 = vpop.f32.mrb[0].mxu0
        %v1013 = vadd.f32 %v493, %v1012
        %v1014 = vpop.f32.mrb[0].mxu0
        %v1015 = vadd.f32 %v489, %v1014
        %v1016 = vpop.f32.mrb[0].mxu0
        %v1017 = vadd.f32 %v493, %v1016
        %1018 = vdwg.mxu0
        %1019 = vmatprep.subr.bf16.mxu0 %v817
        %1020 = vmatpush1.bf16.msra.mxu0 %v816
        %1021 = vmatprep.subr.bf16.mxu0 %v819
        %1022 = vmatpush1.bf16.msra.mxu0 %v818
        %1023 = vmatprep.subr.bf16.mxu0 %v821
        %1024 = vmatpush1.bf16.msra.mxu0 %v820
        %1025 = vmatprep.subr.bf16.mxu0 %v823
        %1026 = vmatpush1.bf16.msra.mxu0 %v822
        %1027 = vmatprep.subr.bf16.mxu0 %v825
        %1028 = vmatpush1.bf16.msra.mxu0 %v824
        %1029 = vmatprep.subr.bf16.mxu0 %v827
        %1030 = vmatpush1.bf16.msra.mxu0 %v826
        %1031 = vmatprep.subr.bf16.mxu0 %v829
        %1032 = vmatpush1.bf16.msra.mxu0 %v828
        %1033 = vmatprep.subr.bf16.mxu0 %v831
        %1034 = vmatpush1.bf16.msra.mxu0 %v830
        %1035 = vmatprep.subr.bf16.mxu0 %v833
        %1036 = vmatpush1.bf16.msra.mxu0 %v832
        %1037 = vmatprep.subr.bf16.mxu0 %v835
        %1038 = vmatpush1.bf16.msra.mxu0 %v834
        %1039 = vmatprep.subr.bf16.mxu0 %v837
        %1040 = vmatpush1.bf16.msra.mxu0 %v836
        %1041 = vmatprep.subr.bf16.mxu0 %v839
        %1042 = vmatpush1.bf16.msra.mxu0 %v838
        %1043 = vmatprep.subr.bf16.mxu0 %v841
        %1044 = vmatpush1.bf16.msra.mxu0 %v840
        %1045 = vmatprep.subr.bf16.mxu0 %v843
        %1046 = vmatpush1.bf16.msra.mxu0 %v842
        %1047 = vmatprep.subr.bf16.mxu0 %v845
        %1048 = vmatpush1.bf16.msra.mxu0 %v844
        %1049 = vmatprep.subr.bf16.mxu0 %v847
        %1050 = vmatpush1.bf16.msra.mxu0 %v846
        %1051 = vmatprep.mubr.bf16.mxu0 %v385
        %1052 = vmatmul.mubr.bf16.gmra.mrb[0].mxu0 %v384
        %v1053 = vpop.f32.mrb[0].mxu0
        %v1054 = vadd.f32 %v1011, %v1053
        %v1055 = vpop.f32.mrb[0].mxu0
        %v1056 = vadd.f32 %v1013, %v1055
        %v1057 = vpop.f32.mrb[0].mxu0
        %v1058 = vadd.f32 %v1015, %v1057
        %v1059 = vpop.f32.mrb[0].mxu0
        %v1060 = vadd.f32 %v1017, %v1059
        %1061 = vdwg.mxu0
        %1062 = vmatprep.subr.bf16.mxu0 %v849
        %1063 = vmatpush1.bf16.msra.mxu0 %v848
        %1064 = vmatprep.subr.bf16.mxu0 %v851
        %1065 = vmatpush1.bf16.msra.mxu0 %v850
        %1066 = vmatprep.subr.bf16.mxu0 %v853
        %1067 = vmatpush1.bf16.msra.mxu0 %v852
        %1068 = vmatprep.subr.bf16.mxu0 %v855
        %1069 = vmatpush1.bf16.msra.mxu0 %v854
        %1070 = vmatprep.subr.bf16.mxu0 %v857
        %1071 = vmatpush1.bf16.msra.mxu0 %v856
        %1072 = vmatprep.subr.bf16.mxu0 %v859
        %1073 = vmatpush1.bf16.msra.mxu0 %v858
        %1074 = vmatprep.subr.bf16.mxu0 %v861
        %1075 = vmatpush1.bf16.msra.mxu0 %v860
        %1076 = vmatprep.subr.bf16.mxu0 %v863
        %1077 = vmatpush1.bf16.msra.mxu0 %v862
        %1078 = vmatprep.subr.bf16.mxu0 %v865
        %1079 = vmatpush1.bf16.msra.mxu0 %v864
        %1080 = vmatprep.subr.bf16.mxu0 %v867
        %1081 = vmatpush1.bf16.msra.mxu0 %v866
        %1082 = vmatprep.subr.bf16.mxu0 %v869
        %1083 = vmatpush1.bf16.msra.mxu0 %v868
        %1084 = vmatprep.subr.bf16.mxu0 %v871
        %1085 = vmatpush1.bf16.msra.mxu0 %v870
        %1086 = vmatprep.subr.bf16.mxu0 %v873
        %1087 = vmatpush1.bf16.msra.mxu0 %v872
        %1088 = vmatprep.subr.bf16.mxu0 %v875
        %1089 = vmatpush1.bf16.msra.mxu0 %v874
        %1090 = vmatprep.subr.bf16.mxu0 %v877
        %1091 = vmatpush1.bf16.msra.mxu0 %v876
        %1092 = vmatprep.subr.bf16.mxu0 %v879
        %1093 = vmatpush1.bf16.msra.mxu0 %v878
        %1094 = vmatprep.mubr.bf16.mxu0 %v387
        %1095 = vmatmul.mubr.bf16.gmra.mrb[0].mxu0 %v386
        %v1096 = vpop.f32.mrb[0].mxu0
        %v1097 = vadd.f32 %v1054, %v1096
        %v1098 = vpop.f32.mrb[0].mxu0
        %v1099 = vadd.f32 %v1056, %v1098
        %v1100 = vpop.f32.mrb[0].mxu0
        %v1101 = vadd.f32 %v1058, %v1100
        %v1102 = vpop.f32.mrb[0].mxu0
        %v1103 = vadd.f32 %v1060, %v1102
        %1104 = vdwg.mxu0
        %v1105 = vmax.f32 %v1097, 0.0
        %v1106 = vmax.f32 %v1099, 0.0
        %v1107 = vmax.f32 %v1101, 0.0
        %v1108 = vmax.f32 %v1103, 0.0
        %v1109 = vpack.c.bf16 %v1107, %v1105
        %v1110 = vpack.c.bf16 %v1108, %v1106
        %v1111 = vld [vmem:[#allocation6] sm:$0xf]
        %v1112 = vld [vmem:[#allocation6 + $0x4] sm:$0xf]
        %v1113 = vld [vmem:[#allocation6 + $0x8] sm:$0xf]
        %v1114 = vld [vmem:[#allocation6 + $0xc] sm:$0xf]
        %v1115 = vld [vmem:[#allocation6 + $0x10] sm:$0xf]
        %v1116 = vld [vmem:[#allocation6 + $0x14] sm:$0xf]
        %v1117 = vld [vmem:[#allocation6 + $0x18] sm:$0xf]
        %v1118 = vld [vmem:[#allocation6 + $0x1c] sm:$0xf]
        %v1119 = vld [vmem:[#allocation6 + $0x20] sm:$0xf]
        %v1120 = vld [vmem:[#allocation6 + $0x24] sm:$0xf]
        %v1121 = vld [vmem:[#allocation6 + $0x28] sm:$0xf]
        %v1122 = vld [vmem:[#allocation6 + $0x2c] sm:$0xf]
        %v1123 = vld [vmem:[#allocation6 + $0x30] sm:$0xf]
        %v1124 = vld [vmem:[#allocation6 + $0x34] sm:$0xf]
        %v1125 = vld [vmem:[#allocation6 + $0x38] sm:$0xf]
        %v1126 = vld [vmem:[#allocation6 + $0x3c] sm:$0xf]
        %v1127 = vld [vmem:[#allocation6 + $0x40] sm:$0xf]
        %v1128 = vld [vmem:[#allocation6 + $0x44] sm:$0xf]
        %v1129 = vld [vmem:[#allocation6 + $0x48] sm:$0xf]
        %v1130 = vld [vmem:[#allocation6 + $0x4c] sm:$0xf]
        %v1131 = vld [vmem:[#allocation6 + $0x50] sm:$0xf]
        %v1132 = vld [vmem:[#allocation6 + $0x54] sm:$0xf]
        %v1133 = vld [vmem:[#allocation6 + $0x58] sm:$0xf]
        %v1134 = vld [vmem:[#allocation6 + $0x5c] sm:$0xf]
        %v1135 = vld [vmem:[#allocation6 + $0x60] sm:$0xf]
        %v1136 = vld [vmem:[#allocation6 + $0x64] sm:$0xf]
        %v1137 = vld [vmem:[#allocation6 + $0x68] sm:$0xf]
        %v1138 = vld [vmem:[#allocation6 + $0x6c] sm:$0xf]
        %v1139 = vld [vmem:[#allocation6 + $0x70] sm:$0xf]
        %v1140 = vld [vmem:[#allocation6 + $0x74] sm:$0xf]
        %v1141 = vld [vmem:[#allocation6 + $0x78] sm:$0xf]
        %v1142 = vld [vmem:[#allocation6 + $0x7c] sm:$0xf]
        %v1143 = vld [vmem:[%s4] sm:$0x1]
        %v1145 = vlaneseq
        %v1146 = vshrl.u32 %v1145, 7
        %v1147 = vsub.s32 0, %v1146
        %v1148 = vrot.slane %v1143, %v1147
        %v1182 = vunpack.c.l.b16 %v1111
        %v1183 = vunpack.c.l.b16 %v1112
        %v1184 = vunpack.c.l.b16 %v1113
        %v1185 = vunpack.c.l.b16 %v1114
        %v1186 = vunpack.c.l.b16 %v1115
        %v1187 = vunpack.c.l.b16 %v1116
        %v1188 = vunpack.c.l.b16 %v1117
        %v1189 = vunpack.c.l.b16 %v1118
        %v1190 = vunpack.c.l.b16 %v1119
        %v1191 = vunpack.c.l.b16 %v1120
        %v1192 = vunpack.c.l.b16 %v1121
        %v1193 = vunpack.c.l.b16 %v1122
        %v1194 = vunpack.c.l.b16 %v1123
        %v1195 = vunpack.c.l.b16 %v1124
        %v1196 = vunpack.c.l.b16 %v1125
        %v1197 = vunpack.c.l.b16 %v1126
        %v1198 = vunpack.c.l.b16 %v1127
        %v1199 = vunpack.c.l.b16 %v1128
        %v1200 = vunpack.c.l.b16 %v1129
        %v1201 = vunpack.c.l.b16 %v1130
        %v1202 = vunpack.c.l.b16 %v1131
        %v1203 = vunpack.c.l.b16 %v1132
        %v1204 = vunpack.c.l.b16 %v1133
        %v1205 = vunpack.c.l.b16 %v1134
        %v1206 = vunpack.c.l.b16 %v1135
        %v1207 = vunpack.c.l.b16 %v1136
        %v1208 = vunpack.c.l.b16 %v1137
        %v1209 = vunpack.c.l.b16 %v1138
        %v1210 = vunpack.c.l.b16 %v1139
        %v1211 = vunpack.c.l.b16 %v1140
        %v1212 = vunpack.c.l.b16 %v1141
        %v1213 = vunpack.c.l.b16 %v1142
        %v1214 = vpack.c.b16 %v1183, %v1182
        %v1215 = vpack.c.b16 %v1185, %v1184
        %v1216 = vpack.c.b16 %v1187, %v1186
        %v1217 = vpack.c.b16 %v1189, %v1188
        %v1218 = vpack.c.b16 %v1191, %v1190
        %v1219 = vpack.c.b16 %v1193, %v1192
        %v1220 = vpack.c.b16 %v1195, %v1194
        %v1221 = vpack.c.b16 %v1197, %v1196
        %v1222 = vpack.c.b16 %v1199, %v1198
        %v1223 = vpack.c.b16 %v1201, %v1200
        %v1224 = vpack.c.b16 %v1203, %v1202
        %v1225 = vpack.c.b16 %v1205, %v1204
        %v1226 = vpack.c.b16 %v1207, %v1206
        %v1227 = vpack.c.b16 %v1209, %v1208
        %v1228 = vpack.c.b16 %v1211, %v1210
        %v1229 = vpack.c.b16 %v1213, %v1212
        %1246 = vmatprep.subr.bf16.mxu0 0
        %1247 = vmatpush1.bf16.msra.mxu0 %v1214
        %1248 = vmatprep.subr.bf16.mxu0 0
        %1249 = vmatpush1.bf16.msra.mxu0 %v1215
        %1250 = vmatprep.subr.bf16.mxu0 0
        %1251 = vmatpush1.bf16.msra.mxu0 %v1216
        %1252 = vmatprep.subr.bf16.mxu0 0
        %1253 = vmatpush1.bf16.msra.mxu0 %v1217
        %1254 = vmatprep.subr.bf16.mxu0 0
        %1255 = vmatpush1.bf16.msra.mxu0 %v1218
        %1256 = vmatprep.subr.bf16.mxu0 0
        %1257 = vmatpush1.bf16.msra.mxu0 %v1219
        %1258 = vmatprep.subr.bf16.mxu0 0
        %1259 = vmatpush1.bf16.msra.mxu0 %v1220
        %1260 = vmatprep.subr.bf16.mxu0 0
        %1261 = vmatpush1.bf16.msra.mxu0 %v1221
        %1262 = vmatprep.subr.bf16.mxu0 0
        %1263 = vmatpush1.bf16.msra.mxu0 %v1222
        %1264 = vmatprep.subr.bf16.mxu0 0
        %1265 = vmatpush1.bf16.msra.mxu0 %v1223
        %1266 = vmatprep.subr.bf16.mxu0 0
        %1267 = vmatpush1.bf16.msra.mxu0 %v1224
        %1268 = vmatprep.subr.bf16.mxu0 0
        %1269 = vmatpush1.bf16.msra.mxu0 %v1225
        %1270 = vmatprep.subr.bf16.mxu0 0
        %1271 = vmatpush1.bf16.msra.mxu0 %v1226
        %1272 = vmatprep.subr.bf16.mxu0 0
        %1273 = vmatpush1.bf16.msra.mxu0 %v1227
        %1274 = vmatprep.subr.bf16.mxu0 0
        %1275 = vmatpush1.bf16.msra.mxu0 %v1228
        %1276 = vmatprep.subr.bf16.mxu0 0
        %1277 = vmatpush1.bf16.msra.mxu0 %v1229
        %1278 = vmatprep.mubr.bf16.mxu0 %v1110
        %1279 = vmatmul.mubr.bf16.gmra.mrb[0].mxu0 %v1109
        %v1280 = vpop.f32.mrb[0].mxu0
        %v1281 = vadd.f32 %v1148, %v1280
        %v1282 = vpop.f32.mrb[0].mxu0
        %v1283 = vpop.f32.mrb[0].mxu0
        %v1284 = vadd.f32 %v1148, %v1283
        %v1285 = vpop.f32.mrb[0].mxu0
        %1286 = vdwg.mxu0
        %1287 = vmax.xlane.f32.xlu0 %v1281
        %v1288 = vpop.xlane.xlu0 %1287
        %1289 = vmax.xlane.f32.xlu0 %v1284
        %v1290 = vpop.xlane.xlu0 %1289
        %v1291 = vsub.f32 %v1281, %v1288
        %v1292 = vsub.f32 %v1284, %v1290
        %v1293 = vmul.f32 %v1291, 1.442695
        %v1294 = vpow.pop %v1293
        %v1295 = vmul.f32 %v1292, 1.442695
        %v1296 = vpow.pop %v1295
        %1297 = vadd.xlane.f32.xlu0 %v1294
        %v1298 = vpop.xlane.xlu0 %1297
        %1299 = vadd.xlane.f32.xlu0 %v1296
        %v1300 = vpop.xlane.xlu0 %1299
        %v1301 = vlog2.pop %v1298
        %v1302 = vmul.f32 %v1301, 0.6931472
        %v1303 = vlog2.pop %v1300
        %v1304 = vmul.f32 %v1303, 0.6931472
        %v1305 = vsub.f32 %v1291, %v1302
        %v1306 = vsub.f32 %v1292, %v1304
        %v1307 = vpack.c.bf16 %v1306, %v1305
        %v1309 = vunpack.c.l.b16 %v1307
        %v1310 = vunpack.c.h.b16 %v1307
        %v1311 = vpack.c.b16 %v1309, %v1309
        %v1312 = vpack.c.b16 %v1310, %v1310
        %1315 = vst [vmem:[%s275] sm:$0xf] %v1311
        %1316 = vst [vmem:[%s275 + $0x4] sm:$0xf] %v1312
        %s1317 = sand.u32 %s138, 1
        %s1318 = sand.u32 %s138, 1
        %s1319 = smul.addr %s1318, 8
        %s1320 = scalar_lea.vmem [#allocation7], %s1319
        // Predicated region
        $region53: #{bert_head_forward.1} parent=39 // pred_check
          %p1321 = pneg %p148
        $region54: #{bert_head_forward.1} parent=39 // pred_check_branch
          %1323 = sbr.rel (%p1321) target = $region56
        $region55: #{bert_head_forward.1} parent=39 // pred_region
          %s1324 = smul.u32 2, %s20
          %s1325 = ssub.s32 3, %s1324
          %p1326 = scmp.lt.s32.totalorder %s1325, 2
          %s1327 = scalar_select %p1326, %s1325, 2
          %s1328 = smul.u32 64, %s1327
          %p1329 = scmp.ne.s32.totalorder 0, %s1328
          %s1330 = smul.addr %s1324, 4
          %s1331 = scalar_lea.vmem %s5, %s1330
          // Predicated region
          $region57: #{bert_head_forward.1} parent=55 // pred_check
            %p1332 = pneg %p1329
          $region58: #{bert_head_forward.1} parent=55 // pred_check_branch
            %1334 = sbr.rel (%p1332) target = $region60
          $region59: #{bert_head_forward.1} parent=55 // pred_region
            // Predicated region
            $region61: #{bert_head_forward.1} parent=59 // pred_check
              _
            $region62: #{bert_head_forward.1} parent=59 // pred_check_branch
              %1336 = sbr.rel target = $region64
            $region63: #{bert_head_forward.1} parent=59 // pred_region
              // Predicated region
              $region83: #{bert_head_forward.1} parent=63 // pred_check
                _
              $region84: #{bert_head_forward.1} parent=63 // pred_check_branch
                %1387 = sbr.rel (0) target = $region86
              $region85: #{bert_head_forward.1} parent=63 // pred_region
                %s1389 = sshrl.u32 %s1327, 1
                // While loop
                $region87: #{bert_head_forward.1} parent=85 // loop_pre_header
                  _
                $region88: #{bert_head_forward.1} parent=85 // loop_header
                  %s1391 = sphi 0, %s1393
                  %p1392 = scmp.ge.s32.totalorder %s1391, %s1389
                  %s1396 = sphi 0, %s1405
                  %s1397 = sphi %s1320, %s1408
                  %s1398 = sphi %s1331, %s1409
                $region89: #{bert_head_forward.1} parent=85 // loop_header_branch
                  %1395 = sbr.rel (%p1392) target = $region93
                $region90: #{bert_head_forward.1} parent=85 // loop_body
                  %v1399 = vld [vmem:[%s1397] sm:$0xf]
                  %1400 = vst [vmem:[%s1398] sm:$0xf] %v1399
                  %v1401 = vld [vmem:[%s1397 + $0x4] sm:$0xf]
                  %1402 = vst [vmem:[%s1398 + $0x4] sm:$0xf] %v1401
                  %s1403 = sadd.s32 1, %s1396
                  %p1404 = scmp.ge.s32.totalorder %s1403, %s1389
                  %s1405 = scalar_select %p1404, 0, %s1403
                  %s1406 = smul.u32 %s1405, 8
                  %s1407 = smul.u32 %s1405, 8
                  %s1408 = scalar_lea.vmem %s1320, %s1406 [#allocation7]
                  %s1409 = scalar_lea.vmem %s1331, %s1407
                $region91: #{bert_head_forward.1} parent=85 // loop_footer
                  %s1393 = sadd.s32 %s1391, 1
                $region92: #{bert_head_forward.1} parent=85 // loop_footer_branch
                  %1390 = sbr.rel target = $region88
                $region93: #{bert_head_forward.1} parent=85 // loop_exit
                  _
                %s1410 = sshrl.u32 %s1327, 1
                %s1411 = sand.u32 %s1327, 1
                %s1412 = smul.u32 %s1410, 2
                %s1413 = smul.u32 4, %s1412
                %s1414 = scalar_lea.vmem %s1320, %s1413 [#allocation7]
                %s1415 = smul.u32 4, %s1412
                %s1416 = scalar_lea.vmem %s1331, %s1415
                // While loop
                $region94: #{bert_head_forward.1} parent=85 // loop_pre_header
                  _
                $region95: #{bert_head_forward.1} parent=85 // loop_header
                  %s1418 = sphi 0, %s1420
                  %p1419 = scmp.ge.s32.totalorder %s1418, %s1411
                  %s1423 = sphi 0, %s1430
                  %s1424 = sphi %s1414, %s1433
                  %s1425 = sphi %s1416, %s1434
                $region96: #{bert_head_forward.1} parent=85 // loop_header_branch
                  %1422 = sbr.rel (%p1419) target = $region100
                $region97: #{bert_head_forward.1} parent=85 // loop_body
                  %v1426 = vld [vmem:[%s1424] sm:$0xf]
                  %1427 = vst [vmem:[%s1425] sm:$0xf] %v1426
                  %s1428 = sadd.s32 1, %s1423
                  %p1429 = scmp.ge.s32.totalorder %s1428, %s1411
                  %s1430 = scalar_select %p1429, 0, %s1428
                  %s1431 = smul.u32 %s1430, 4
                  %s1432 = smul.u32 %s1430, 4
                  %s1433 = scalar_lea.vmem %s1414, %s1431 [#allocation7]
                  %s1434 = scalar_lea.vmem %s1416, %s1432
                $region98: #{bert_head_forward.1} parent=85 // loop_footer
                  %s1420 = sadd.s32 %s1418, 1
                $region99: #{bert_head_forward.1} parent=85 // loop_footer_branch
                  %1417 = sbr.rel target = $region95
                $region100: #{bert_head_forward.1} parent=85 // loop_exit
                  _
              $region86: #{bert_head_forward.1} parent=63 // pred_fallthru
                _
            $region64: #{bert_head_forward.1} parent=59 // pred_fallthru
              _
            // Predicated region
            $region65: #{bert_head_forward.1} parent=59 // pred_check
              _
            $region66: #{bert_head_forward.1} parent=59 // pred_check_branch
              %1338 = sbr.rel (0) target = $region68
            $region67: #{bert_head_forward.1} parent=59 // pred_region
              %s1340 = sshrl.u32 %s1327, 1
              // While loop
              $region69: #{bert_head_forward.1} parent=67 // loop_pre_header
                _
              $region70: #{bert_head_forward.1} parent=67 // loop_header
                %s1342 = sphi 0, %s1344
                %p1343 = scmp.ge.s32.totalorder %s1342, %s1340
                %s1347 = sphi 0, %s1356
                %s1348 = sphi %s1320, %s1359
                %s1349 = sphi %s1331, %s1360
              $region71: #{bert_head_forward.1} parent=67 // loop_header_branch
                %1346 = sbr.rel (%p1343) target = $region75
              $region72: #{bert_head_forward.1} parent=67 // loop_body
                %v1350 = vld [vmem:[%s1348] sm:$0xf]
                %1351 = vst [vmem:[%s1349] sm:$0xf] %v1350
                %v1352 = vld [vmem:[%s1348 + $0x4] sm:$0xf]
                %1353 = vst [vmem:[%s1349 + $0x4] sm:$0xf] %v1352
                %s1354 = sadd.s32 1, %s1347
                %p1355 = scmp.ge.s32.totalorder %s1354, %s1340
                %s1356 = scalar_select %p1355, 0, %s1354
                %s1357 = smul.u32 %s1356, 8
                %s1358 = smul.u32 %s1356, 8
                %s1359 = scalar_lea.vmem %s1320, %s1357 [#allocation7]
                %s1360 = scalar_lea.vmem %s1331, %s1358
              $region73: #{bert_head_forward.1} parent=67 // loop_footer
                %s1344 = sadd.s32 %s1342, 1
              $region74: #{bert_head_forward.1} parent=67 // loop_footer_branch
                %1341 = sbr.rel target = $region70
              $region75: #{bert_head_forward.1} parent=67 // loop_exit
                _
              %s1361 = sshrl.u32 %s1327, 1
              %s1362 = sand.u32 %s1327, 1
              %s1363 = smul.u32 %s1361, 2
              %s1364 = smul.u32 4, %s1363
              %s1365 = scalar_lea.vmem %s1320, %s1364 [#allocation7]
              %s1366 = smul.u32 4, %s1363
              %s1367 = scalar_lea.vmem %s1331, %s1366
              // While loop
              $region76: #{bert_head_forward.1} parent=67 // loop_pre_header
                _
              $region77: #{bert_head_forward.1} parent=67 // loop_header
                %s1369 = sphi 0, %s1371
                %p1370 = scmp.ge.s32.totalorder %s1369, %s1362
                %s1374 = sphi 0, %s1381
                %s1375 = sphi %s1365, %s1384
                %s1376 = sphi %s1367, %s1385
              $region78: #{bert_head_forward.1} parent=67 // loop_header_branch
                %1373 = sbr.rel (%p1370) target = $region82
              $region79: #{bert_head_forward.1} parent=67 // loop_body
                %v1377 = vld [vmem:[%s1375] sm:$0xf]
                %1378 = vst [vmem:[%s1376] sm:$0xf] %v1377
                %s1379 = sadd.s32 1, %s1374
                %p1380 = scmp.ge.s32.totalorder %s1379, %s1362
                %s1381 = scalar_select %p1380, 0, %s1379
                %s1382 = smul.u32 %s1381, 4
                %s1383 = smul.u32 %s1381, 4
                %s1384 = scalar_lea.vmem %s1365, %s1382 [#allocation7]
                %s1385 = scalar_lea.vmem %s1367, %s1383
              $region80: #{bert_head_forward.1} parent=67 // loop_footer
                %s1371 = sadd.s32 %s1369, 1
              $region81: #{bert_head_forward.1} parent=67 // loop_footer_branch
                %1368 = sbr.rel target = $region77
              $region82: #{bert_head_forward.1} parent=67 // loop_exit
                _
            $region68: #{bert_head_forward.1} parent=59 // pred_fallthru
              _
          $region60: #{bert_head_forward.1} parent=55 // pred_fallthru
            _
          %1435 = vnop
        $region56: #{bert_head_forward.1} parent=39 // pred_fallthru
          _
      $region40: #{bert_head_forward.1} parent=5 // pred_fallthru
        _
      %p1436 = scmp.le.s32.totalorder 2, %s15
      // Predicated region
      $region101: #{bert_head_forward.1} parent=5 // pred_check
        %p1437 = pneg %p1436
      $region102: #{bert_head_forward.1} parent=5 // pred_check_branch
        %1439 = sbr.rel (%p1437) target = $region104
      $region103: #{bert_head_forward.1} parent=5 // pred_region
        %s1440 = ssub.s32 %s15, 2
        // Predicated region
        $region105: #{bert_head_forward.1} parent=103 // pred_check
          %p1441 = pneg %p154
        $region106: #{bert_head_forward.1} parent=103 // pred_check_branch
          %1443 = sbr.rel (%p1441) target = $region108
        $region107: #{bert_head_forward.1} parent=103 // pred_region
          %s1444 = sand.u32 %s139, 1
          %s1445 = sand.u32 %s139, 1
          %s1446 = smul.addr %s1445, 8
          %s1447 = scalar_lea.vmem [#allocation7], %s1446
        $region108: #{bert_head_forward.1} parent=103 // pred_fallthru
          _
      $region104: #{bert_head_forward.1} parent=5 // pred_fallthru
        _
    $region6: #{bert_head_forward.1} parent=1 // loop_footer
      %s19 = sadd.s32 1, %s15
    $region7: #{bert_head_forward.1} parent=1 // loop_footer_branch
      %14 = sbr.rel target = $region3
    $region8: #{bert_head_forward.1} parent=1 // loop_exit
      _
    %1448 = vsyncpa [#allocation3], 1
    %s1449 = scalar_lea.sflag [#allocation3], 1
    %1450 = vsyncpa %s1449, 1
    %1451 = vsyncpa [#allocation5], 1

</llo_original>
